<compile_context>
chip_gen: v7x
topology: tpu7x:2x2x1
jax: 0.10.0
libtpu: 0.0.40
codegen_flags: <defaults>
</compile_context>

<pallas_src>
from functools import partial

import jax
import jax.numpy as jnp
from jax.experimental import pallas as pl
from jax.experimental.pallas import tpu as pltpu


def _self_attn_kernel(x_ref, wproj_ref, bproj_ref, ww_ref, bw_ref, o_ref, *,
                      key_channels, value_channels, s_valid, compute_dtype):
    """One batch element per grid step; channels-first / lane-dense layout.

    x_ref     : (Cin, S)        input, spatial flattened + zero-padded to S
    wproj_ref : (Kc+Vc+1, Cin)  fused [f_key*BN*Kc**-0.25 ; f_value ; zero row]
    bproj_ref : (Kc+Vc+1, 1)    fused [folded BN shift    ; value bias ; 1.0]
    ww_ref    : (Cout, Vc)      W weight
    bw_ref    : (Cout, 1)       W bias
    o_ref     : (Cout, S)       output (padded lanes hold garbage; wrapper
                                strips them)
    """
    kc, vc = key_channels, value_channels
    s_pad = x_ref.shape[-1]

    x = x_ref[...]                                                  # (Cin, S)

    # Fused projections: one MXU pass yields key/query, value AND a ones row
    # (zero weights + bias 1) used below as the softmax denominator operand.
    kqv = jnp.dot(wproj_ref[...], x,
                  preferred_element_type=jnp.float32) + bproj_ref[...]
    kq = kqv[:kc].astype(compute_dtype)                             # (Kc, S)
    v_ext = kqv[kc:].astype(compute_dtype)                          # (Vc+1, S)

    # sim[i, j] = sum_c kq[c, i] * kq[c, j]; Kc**-0.5 already folded into wk.
    sim = jax.lax.dot_general(
        kq, kq, (((0,), (0,)), ((), ())),
        preferred_element_type=jnp.float32)                         # (S, S) f32

    if s_valid < s_pad:
        # Padded key columns must not contribute to the softmax.
        col = jax.lax.broadcasted_iota(jnp.int32, (1, s_pad), 1)
        sim = jnp.where(col < s_valid, sim, -1e30)

    # Numerically stable softmax numerator, f32 elementwise (v5e has no bf16
    # VPU/EUP path); normalisation deferred past the PV matmul.  The single
    # f32->bf16 cast of p is cheap VPU filler next to the S^2 EUP exp.
    sim = sim - jnp.max(sim, axis=-1, keepdims=True)
    p = jnp.exp(sim).astype(compute_dtype)                          # (S, S)

    # ctx_ext[c, i] = sum_j v_ext[c, j] * p[i, j]; the appended ones row of
    # v_ext makes row Vc the softmax denominator -- no separate M=1 GEMM.
    ctx_ext = jax.lax.dot_general(
        v_ext, p, (((1,), (1,)), ((), ())),
        preferred_element_type=jnp.float32)                         # (Vc+1, S)

    denom = ctx_ext[vc:vc + 1]                                      # (1, S)
    inv = pl.reciprocal(denom, approx=True)                         # EUP slot
    inv = inv * (2.0 - denom * inv)                                 # Newton step
    ctx = ctx_ext[:vc] * inv                                        # (Vc, S)

    # Output 1x1x1 conv W.
    out = jnp.dot(ww_ref[...], ctx,
                  preferred_element_type=jnp.float32) + bw_ref[...]
    o_ref[...] = out.astype(o_ref.dtype)


def self_attention_block(x, params, *, key_channels, value_channels,
                         out_channels, compute_dtype=jnp.bfloat16):
    """x: (N, Cin, D, H, W) f32 -> (N, Cout, D, H, W) f32.

    compute_dtype feeds the operands of the two (S, S) GEMMs (accumulation is
    always f32).  bf16 (default) is MXU-native on v5e/v6e/v7x; pass
    jnp.float32 for bit-tight agreement with the reference.
    """
    N, Cin, D, H, W = x.shape
    S = D * H * W
    S_pad = 128 * pl.cdiv(S, 128)                 # lane-dense last dim
    Kc, Vc, Cout = key_channels, value_channels, out_channels

    # --- constant folding (host side, free) ---------------------------------
    eps = 1e-5
    bn_scale = params["bn_gamma"] / jnp.sqrt(params["bn_var"] + eps)     # (Kc,)
    bn_shift = params["bn_beta"] + (params["bk"] - params["bn_mean"]) * bn_scale
    qk_scale = float(key_channels) ** -0.25   # shared by query & key -> Kc**-0.5
    wk_f = params["wk"] * (bn_scale * qk_scale)[:, None]                 # (Kc, Cin)
    shiftk = (bn_shift * qk_scale).reshape(Kc, 1)

    # Fused projection: [key/query ; value ; ones-row generator].
    w_proj = jnp.concatenate(
        [wk_f, params["wv"], jnp.zeros((1, Cin), x.dtype)], axis=0)      # (Kc+Vc+1, Cin)
    b_proj = jnp.concatenate(
        [shiftk, params["bv"].reshape(Vc, 1), jnp.ones((1, 1), x.dtype)],
        axis=0)                                                          # (Kc+Vc+1, 1)
    ww = params["ww"]                                                    # (Cout, Vc)
    bw = params["bw"].reshape(Cout, 1)

    # Channels-first with the flattened spatial axis last; zero-pad S.
    x_flat = x.reshape(N, Cin, S)
    if S_pad != S:
        x_flat = jnp.pad(x_flat, ((0, 0), (0, 0), (0, S_pad - S)))

    # --- generation-aware VMEM budget ---------------------------------------
    try:
        vmem_cap = int(pltpu.get_tpu_info().vmem_capacity_bytes)
    except Exception:                                   # fallback: v5e/v6e size
        vmem_cap = 128 * 2 ** 20
    cbytes = jnp.dtype(compute_dtype).itemsize
    vmem_est = (2 * S_pad * S_pad * 4 + S_pad * S_pad * cbytes           # sim + p
                + 4 * S_pad * (2 * Cin + 2 * Cout)                       # dbl-buffered i/o
                + 4 * S_pad * (2 * (Kc + Vc + 1) + Vc)                   # kqv / ctx
                + 8 * ((Kc + Vc + 1) * (Cin + 1) + Cout * (Vc + 1)))     # weights
    vmem_limit = int(min(int(0.75 * vmem_cap),      # ~48 MiB v7x, ~96 MiB v5e/v6e
                         max(32 * 2 ** 20, 2 * vmem_est)))

    flops = 2 * N * (S_pad * Cin * (Kc + Vc + 1)
                     + S_pad * S_pad * (Kc + Vc + 1)
                     + S_pad * Vc * Cout)
    bytes_accessed = 4 * (N * S_pad * (Cin + Cout)
                          + (Kc + Vc + 1) * (Cin + 1) + Cout * (Vc + 1))

    kernel = partial(_self_attn_kernel, key_channels=Kc, value_channels=Vc,
                     s_valid=S, compute_dtype=compute_dtype)

    out_flat = pl.pallas_call(
        kernel,
        out_shape=jax.ShapeDtypeStruct((N, Cout, S_pad), x.dtype),
        grid_spec=pltpu.PrefetchScalarGridSpec(
            num_scalar_prefetch=0,
            # One batch element per step: bounds the S^2 live set, and with
            # "parallel" semantics >=2 steps feed both v7x TensorCores.
            grid=(N,),
            in_specs=[
                pl.BlockSpec((None, Cin, S_pad), lambda b: (b, 0, 0)),
                # Weight/bias index maps ignore the grid index so they stay
                # VMEM-resident (no re-DMA per step).
                pl.BlockSpec((Kc + Vc + 1, Cin), lambda b: (0, 0)),
                pl.BlockSpec((Kc + Vc + 1, 1), lambda b: (0, 0)),
                pl.BlockSpec((Cout, Vc), lambda b: (0, 0)),
                pl.BlockSpec((Cout, 1), lambda b: (0, 0)),
            ],
            out_specs=pl.BlockSpec((None, Cout, S_pad), lambda b: (b, 0, 0)),
        ),
        compiler_params=pltpu.CompilerParams(
            dimension_semantics=("parallel",),
            vmem_limit_bytes=vmem_limit),
        cost_estimate=pl.CostEstimate(
            flops=flops,
            transcendentals=N * S_pad * S_pad,
            bytes_accessed=bytes_accessed),
    )(x_flat, w_proj, b_proj, ww, bw)

    # Strip lane padding, restore spatial dims (already channels-first).
    return out_flat[:, :, :S].reshape(N, Cout, D, H, W)


def _reference(x, params, *, key_channels, value_channels, out_channels):
    """Pure-JAX reference mirroring the PyTorch forward (inference-mode BN)."""
    N, Cin, D, H, W = x.shape
    S = D * H * W
    eps = 1e-5
    x_f = x.reshape(N, Cin, S)                                    # (N, Cin, S)

    def conv1x1(xf, w, b):  # (N,Cin,S),(Co,Cin),(Co,) -> (N,Co,S)
        return jnp.einsum("oc,ncs->nos", w, xf) + b[None, :, None]

    kq = conv1x1(x_f, params["wk"], params["bk"])
    kq = (kq - params["bn_mean"][None, :, None]) / jnp.sqrt(
        params["bn_var"][None, :, None] + eps)
    kq = kq * params["bn_gamma"][None, :, None] + params["bn_beta"][None, :, None]

    value = conv1x1(x_f, params["wv"], params["bv"])              # (N,Vc,S)
    value = jnp.transpose(value, (0, 2, 1))                       # (N,S,Vc)
    query = jnp.transpose(kq, (0, 2, 1))                          # (N,S,Kc)
    key = kq                                                      # (N,Kc,S)

    sim = jnp.matmul(query, key) * (key_channels ** -0.5)
    sim = jax.nn.softmax(sim, axis=-1)
    ctx = jnp.matmul(sim, value)                                  # (N,S,Vc)
    ctx = jnp.transpose(ctx, (0, 2, 1))                           # (N,Vc,S)
    out = jnp.einsum("oc,ncs->nos", params["ww"], ctx) + params["bw"][None, :, None]
    return out.reshape(N, out_channels, D, H, W)


if __name__ == "__main__":
    # Module config (matches SelfAttentionBlock(in_channels=8) defaults):
    N, Cin, D, H, W = 2, 8, 4, 4, 4
    Kc = Cin // 2          # key_channels
    Vc = Cin // 2          # value_channels
    Cout = Cin             # out_channels

    key = jax.random.PRNGKey(0)
    ks = jax.random.split(key, 10)

    x = jax.random.normal(ks[0], (N, Cin, D, H, W), dtype=jnp.float32)

    params = {
        "wk": jax.random.normal(ks[1], (Kc, Cin), jnp.float32) * 0.2,
        "bk": jax.random.normal(ks[2], (Kc,), jnp.float32) * 0.1,
        "bn_gamma": 1.0 + 0.1 * jax.random.normal(ks[3], (Kc,), jnp.float32),
        "bn_beta": 0.1 * jax.random.normal(ks[4], (Kc,), jnp.float32),
        "bn_mean": 0.1 * jax.random.normal(ks[5], (Kc,), jnp.float32),
        "bn_var": 1.0 + 0.1 * jax.random.uniform(ks[6], (Kc,), jnp.float32),
        "wv": jax.random.normal(ks[7], (Vc, Cin), jnp.float32) * 0.2,
        "bv": jax.random.normal(ks[8], (Vc,), jnp.float32) * 0.1,
        "ww": jax.random.normal(ks[9], (Cout, Vc), jnp.float32) * 0.2,
        "bw": jnp.linspace(-0.1, 0.1, Cout, dtype=jnp.float32),
    }

    ref = _reference(x, params, key_channels=Kc, value_channels=Vc,
                     out_channels=Cout)

    # Default bf16 MXU path (looser tolerance for the (S,S) GEMM operands).
    out_bf16 = jax.block_until_ready(self_attention_block(
        x, params, key_channels=Kc, value_channels=Vc, out_channels=Cout))
    assert out_bf16.shape == (N, Cout, D, H, W), out_bf16.shape
    assert jnp.allclose(out_bf16, ref, atol=5e-2, rtol=5e-2), (
        float(jnp.max(jnp.abs(out_bf16 - ref))))

    # f32 path: tight agreement with the reference.
    out_f32 = jax.block_until_ready(self_attention_block(
        x, params, key_channels=Kc, value_channels=Vc, out_channels=Cout,
        compute_dtype=jnp.float32))
    assert jnp.allclose(out_f32, ref, atol=1e-4, rtol=1e-4), (
        float(jnp.max(jnp.abs(out_f32 - ref))))

    print("KERNEL_OK")
</pallas_src>

<mosaic_0001>
module attributes {stable_mosaic.version = 11 : i64} {
  func.func @_self_attn_kernel(%arg0: i32, %arg1: memref<1x8x128xf32, #tpu.memory_space<vmem>>, %arg2: memref<9x8xf32, #tpu.memory_space<vmem>>, %arg3: memref<9x1xf32, #tpu.memory_space<vmem>>, %arg4: memref<8x4xf32, #tpu.memory_space<vmem>>, %arg5: memref<8x1xf32, #tpu.memory_space<vmem>>, %arg6: memref<1x8x128xf32, #tpu.memory_space<vmem>>) attributes {dimension_semantics = [#tpu.dimension_semantics<parallel>], iteration_bounds = array<i64: 2>, scalar_prefetch = 0 : i64, scratch_operands = 0 : i64, tpu.core_type = #tpu.core_type<tc>, window_params = [{transform_indices = @transform_0, window_bounds = array<i64: 1, 8, 128>}, {pipeline_mode = #tpu.pipeline_mode<synchronous>, transform_indices = @transform_1, window_bounds = array<i64: 9, 8>}, {pipeline_mode = #tpu.pipeline_mode<synchronous>, transform_indices = @transform_2, window_bounds = array<i64: 9, 1>}, {pipeline_mode = #tpu.pipeline_mode<synchronous>, transform_indices = @transform_3, window_bounds = array<i64: 8, 4>}, {pipeline_mode = #tpu.pipeline_mode<synchronous>, transform_indices = @transform_4, window_bounds = array<i64: 8, 1>}, {transform_indices = @transform_5, window_bounds = array<i64: 1, 8, 128>}]} {
    %c0 = arith.constant 0 : index
    %c0_0 = arith.constant 0 : index
    %c0_1 = arith.constant 0 : index
    %0 = vector.load %arg1[%c0, %c0_0, %c0_1] : memref<1x8x128xf32, #tpu.memory_space<vmem>>, vector<1x8x128xf32>
    %1 = vector.shape_cast %0 : vector<1x8x128xf32> to vector<8x128xf32>
    %c0_2 = arith.constant 0 : index
    %c0_3 = arith.constant 0 : index
    %2 = vector.load %arg2[%c0_2, %c0_3] : memref<9x8xf32, #tpu.memory_space<vmem>>, vector<9x8xf32>
    %cst = arith.constant dense<0.000000e+00> : vector<9x128xf32>
    %3 = tpu.matmul %2, %1, %cst {dimension_numbers = #tpu.dot_dimension_numbers<[1], [0], [0], [1], [0, 0, 1, 1], [], []>} : vector<9x8xf32>, vector<8x128xf32>, vector<9x128xf32> -> vector<9x128xf32>
    %c0_4 = arith.constant 0 : index
    %c0_5 = arith.constant 0 : index
    %4 = vector.load %arg3[%c0_4, %c0_5] : memref<9x1xf32, #tpu.memory_space<vmem>>, vector<9x1xf32>
    %5 = vector.broadcast %4 : vector<9x1xf32> to vector<9x128xf32>
    %6 = arith.addf %3, %5 : vector<9x128xf32>
    %7 = vector.extract_strided_slice %6 {offsets = [0, 0], sizes = [4, 128], strides = [1, 1]} : vector<9x128xf32> to vector<4x128xf32>
    %8 = arith.truncf %7 : vector<4x128xf32> to vector<4x128xbf16>
    %9 = vector.extract_strided_slice %6 {offsets = [4, 0], sizes = [5, 128], strides = [1, 1]} : vector<9x128xf32> to vector<5x128xf32>
    %10 = arith.truncf %9 : vector<5x128xf32> to vector<5x128xbf16>
    %cst_6 = arith.constant dense<0.000000e+00> : vector<128x128xf32>
    %11 = tpu.matmul %8, %8, %cst_6 {dimension_numbers = #tpu.dot_dimension_numbers<[0], [0], [1], [1], [0, 1, 1, 1], [], []>} : vector<4x128xbf16>, vector<4x128xbf16>, vector<128x128xf32> -> vector<128x128xf32>
    %12 = tpu.iota {dimensions = array<i32: 1>} : vector<1x128xi32>
    %c64_i32 = arith.constant 64 : i32
    %13 = vector.broadcast %c64_i32 : i32 to vector<1x128xi32>
    %14 = arith.cmpi slt, %12, %13 : vector<1x128xi32>
    %cst_7 = arith.constant -1.000000e+30 : f32
    %15 = vector.shape_cast %14 : vector<1x128xi1> to vector<1x128xi1>
    %16 = vector.broadcast %15 : vector<1x128xi1> to vector<128x128xi1>
    %17 = vector.broadcast %cst_7 : f32 to vector<128x128xf32>
    %18 = arith.select %16, %11, %17 : vector<128x128xi1>, vector<128x128xf32>
    %cst_8 = arith.constant dense<0xFF800000> : vector<128xf32>
    %19 = vector.multi_reduction <maximumf>, %18, %cst_8 [1] : vector<128x128xf32> to vector<128xf32>
    %20 = vector.shape_cast %19 : vector<128xf32> to vector<128x1xf32>
    %21 = vector.broadcast %20 : vector<128x1xf32> to vector<128x128xf32>
    %22 = arith.subf %18, %21 : vector<128x128xf32>
    %23 = math.exp %22 : vector<128x128xf32>
    %24 = arith.truncf %23 : vector<128x128xf32> to vector<128x128xbf16>
    %cst_9 = arith.constant dense<0.000000e+00> : vector<5x128xf32>
    %25 = tpu.matmul %10, %24, %cst_9 {dimension_numbers = #tpu.dot_dimension_numbers<[1], [1], [0], [0], [0, 0, 1, 0], [], []>} : vector<5x128xbf16>, vector<128x128xbf16>, vector<5x128xf32> -> vector<5x128xf32>
    %26 = vector.extract_strided_slice %25 {offsets = [4, 0], sizes = [1, 128], strides = [1, 1]} : vector<5x128xf32> to vector<1x128xf32>
    %27 = tpu.reciprocal %26 {approx = true} : vector<1x128xf32> -> vector<1x128xf32>
    %28 = arith.mulf %26, %27 : vector<1x128xf32>
    %cst_10 = arith.constant 2.000000e+00 : f32
    %29 = vector.broadcast %cst_10 : f32 to vector<1x128xf32>
    %30 = arith.subf %29, %28 : vector<1x128xf32>
    %31 = arith.mulf %27, %30 : vector<1x128xf32>
    %32 = vector.extract_strided_slice %25 {offsets = [0, 0], sizes = [4, 128], strides = [1, 1]} : vector<5x128xf32> to vector<4x128xf32>
    %33 = vector.broadcast %31 : vector<1x128xf32> to vector<4x128xf32>
    %34 = arith.mulf %32, %33 : vector<4x128xf32>
    %c0_11 = arith.constant 0 : index
    %c0_12 = arith.constant 0 : index
    %35 = vector.load %arg4[%c0_11, %c0_12] : memref<8x4xf32, #tpu.memory_space<vmem>>, vector<8x4xf32>
    %cst_13 = arith.constant dense<0.000000e+00> : vector<8x128xf32>
    %36 = tpu.matmul %35, %34, %cst_13 {dimension_numbers = #tpu.dot_dimension_numbers<[1], [0], [0], [1], [0, 0, 1, 1], [], []>} : vector<8x4xf32>, vector<4x128xf32>, vector<8x128xf32> -> vector<8x128xf32>
    %c0_14 = arith.constant 0 : index
    %c0_15 = arith.constant 0 : index
    %37 = vector.load %arg5[%c0_14, %c0_15] : memref<8x1xf32, #tpu.memory_space<vmem>>, vector<8x1xf32>
    %38 = vector.broadcast %37 : vector<8x1xf32> to vector<8x128xf32>
    %39 = arith.addf %36, %38 : vector<8x128xf32>
    %c0_16 = arith.constant 0 : index
    %c0_17 = arith.constant 0 : index
    %c0_18 = arith.constant 0 : index
    %40 = vector.load %arg6[%c0_16, %c0_17, %c0_18] : memref<1x8x128xf32, #tpu.memory_space<vmem>>, vector<1x8x128xf32>
    %41 = vector.shape_cast %40 : vector<1x8x128xf32> to vector<8x128xf32>
    %42 = vector.shape_cast %39 : vector<8x128xf32> to vector<1x8x128xf32>
    tpu.vector_store %arg6[%c0_16, %c0_17, %c0_18], %42 {strides = array<i32>} : memref<1x8x128xf32, #tpu.memory_space<vmem>>, vector<1x8x128xf32>,
    return
  }
  func.func @transform_0(%arg0: i32) -> (i32, i32, i32) {
    %c0_i32 = arith.constant 0 : i32
    %c0_i32_0 = arith.constant 0 : i32
    %c0_i32_1 = arith.constant 0 : i32
    return %arg0, %c0_i32, %c0_i32_0 : i32, i32, i32
  }
  func.func @transform_1(%arg0: i32) -> (i32, i32) {
    %c0_i32 = arith.constant 0 : i32
    %c0_i32_0 = arith.constant 0 : i32
    %c0_i32_1 = arith.constant 0 : i32
    return %c0_i32, %c0_i32_0 : i32, i32
  }
  func.func @transform_2(%arg0: i32) -> (i32, i32) {
    %c0_i32 = arith.constant 0 : i32
    %c0_i32_0 = arith.constant 0 : i32
    %c0_i32_1 = arith.constant 0 : i32
    return %c0_i32, %c0_i32_0 : i32, i32
  }
  func.func @transform_3(%arg0: i32) -> (i32, i32) {
    %c0_i32 = arith.constant 0 : i32
    %c0_i32_0 = arith.constant 0 : i32
    %c0_i32_1 = arith.constant 0 : i32
    return %c0_i32, %c0_i32_0 : i32, i32
  }
  func.func @transform_4(%arg0: i32) -> (i32, i32) {
    %c0_i32 = arith.constant 0 : i32
    %c0_i32_0 = arith.constant 0 : i32
    %c0_i32_1 = arith.constant 0 : i32
    return %c0_i32, %c0_i32_0 : i32, i32
  }
  func.func @transform_5(%arg0: i32) -> (i32, i32, i32) {
    %c0_i32 = arith.constant 0 : i32
    %c0_i32_0 = arith.constant 0 : i32
    %c0_i32_1 = arith.constant 0 : i32
    return %arg0, %c0_i32, %c0_i32_0 : i32, i32, i32
  }
}

</mosaic_0001>

<llo_original>
// kernel: tpu_custom_call.1
$region0: #{tpu_custom_call.1}
  #allocation0 [shape = 'u32[]', space=smem, size = 0x4, offset = 0x4, fixed_abs, tag = 'smem constant byte address 0x4 - core index']
  #allocation1 [shape = 'u32[144,128]{1,0:T(1,128)}', space=vmem, size = 0x12000, scoped, tag = 'internal scratch']
  %s0 = inlined_call_operand.vmem [shape: f32[2,8,128], index: 0, kind: input, shape index: {}]
  %s1 = inlined_call_operand.vmem [shape: f32[9,8], index: 1, kind: input, shape index: {}]
  %s2 = inlined_call_operand.vmem [shape: f32[9,1], index: 2, kind: input, shape index: {}]
  %s3 = inlined_call_operand.vmem [shape: f32[8,4], index: 3, kind: input, shape index: {}]
  %s4 = inlined_call_operand.vmem [shape: f32[8,1], index: 4, kind: input, shape index: {}]
  %s5 = inlined_call_operand.hbm [shape: f32[2,8,128], index: 5, kind: output, shape index: {}]
  %s6 = sld [smem:[#allocation0]]
  $region53: #{tpu_custom_call.1} parent=0
    _
  %s8 = ssub.s32 1, %s6
  %s9 = scalar_select 0, %s8, %s6
  $region1: #{tpu_custom_call.1} parent=0
    #allocation2 [shape = 'u8[8192]{0}', space=vmem, size = 0x2000, scoped, tag = 'output window, operand 0']
    #allocation3 [shape = 's32[2]{0}', space=sflag, size = 0x8, scoped, tag = 'scoped memory for tpu_custom_call.1']
    %10 = vsyncpa [#allocation3], 0
    %s11 = scalar_lea.sflag [#allocation3], 1
    %12 = vsyncpa %s11, 0
    loop: start=0, step=1, limit=4
    $region2: #{tpu_custom_call.1} parent=1 // loop_pre_header
      _
    $region3: #{tpu_custom_call.1} parent=1 // loop_header
      %s14 = sphi 0, %s18
      %p15 = scmp.ge.s32.totalorder %s14, 4
      %s24 = sphi 0, %s26
      %s27 = sphi 0, %s24
      %s28 = sphi 0, %s27
      %s44 = sphi 0, %s28
      %s48 = sphi 0, %s48
      %s50 = sphi 0, %s48
      %s51 = sphi 0, %s50
      %s65 = sphi 0, %s51
      %s69 = sphi 0, %s69
      %s71 = sphi 0, %s69
      %s72 = sphi 0, %s71
      %s86 = sphi 0, %s72
      %s90 = sphi 0, %s90
      %s92 = sphi 0, %s90
      %s93 = sphi 0, %s92
      %s107 = sphi 0, %s93
      %s111 = sphi 0, %s111
      %s113 = sphi 0, %s111
      %s114 = sphi 0, %s113
      %s128 = sphi 0, %s114
      %s134 = sphi 0, %s136
      %s137 = sphi 0, %s134
      %s138 = sphi 0, %s137
      %s154 = sphi 0, %s138
    $region4: #{tpu_custom_call.1} parent=1 // loop_header_branch
      %17 = sbr.rel (%p15) target = $region8
    $region5: #{tpu_custom_call.1} parent=1 // loop_body
      %s19 = ssub.s32 %s14, 1
      %s20 = ssub.s32 %s14, 2
      %s21 = sadd.s32 %s14, 1
      %s22 = ssub.s32 %s14, %s21
      %p23 = scmp.eq.s32.totalorder %s22, 0
      %s25 = sadd.s32 %s24, 1
      %s26 = scalar_select %p23, %s24, %s25
      %p29 = pneg %p23
      %p30 = scmp.eq.s32.totalorder %s14, 1
      %p31 = por %p29, %p30
      %p32 = scmp.ne.s32.totalorder %s24, %s27
      %p33 = scmp.eq.s32.totalorder %s14, 0
      %p34 = por %p32, %p33
      %p35 = scmp.ne.s32.totalorder %s24, %s27
      %p36 = scmp.eq.s32.totalorder %s19, 1
      %p37 = por %p35, %p36
      %p38 = scmp.ne.s32.totalorder %s27, %s28
      %p39 = scmp.eq.s32.totalorder %s19, 0
      %p40 = por %p38, %p39
      %p41 = scmp.ne.s32.totalorder %s27, %s28
      %p42 = scmp.eq.s32.totalorder %s20, 1
      %p43 = por %p41, %p42
      %p45 = scmp.ne.s32.totalorder %s28, %s44
      %p46 = scmp.eq.s32.totalorder %s20, 0
      %p47 = por %p45, %p46
      %s49 = sadd.s32 %s48, 1
      %p52 = scmp.eq.s32.totalorder %s14, 1
      %p53 = scmp.ne.s32.totalorder %s48, %s50
      %p54 = scmp.eq.s32.totalorder %s14, 0
      %p55 = por %p53, %p54
      %p56 = scmp.ne.s32.totalorder %s48, %s50
      %p57 = scmp.eq.s32.totalorder %s19, 1
      %p58 = por %p56, %p57
      %p59 = scmp.ne.s32.totalorder %s50, %s51
      %p60 = scmp.eq.s32.totalorder %s19, 0
      %p61 = por %p59, %p60
      %p62 = scmp.ne.s32.totalorder %s50, %s51
      %p63 = scmp.eq.s32.totalorder %s20, 1
      %p64 = por %p62, %p63
      %p66 = scmp.ne.s32.totalorder %s51, %s65
      %p67 = scmp.eq.s32.totalorder %s20, 0
      %p68 = por %p66, %p67
      %s70 = sadd.s32 %s69, 1
      %p73 = scmp.eq.s32.totalorder %s14, 1
      %p74 = scmp.ne.s32.totalorder %s69, %s71
      %p75 = scmp.eq.s32.totalorder %s14, 0
      %p76 = por %p74, %p75
      %p77 = scmp.ne.s32.totalorder %s69, %s71
      %p78 = scmp.eq.s32.totalorder %s19, 1
      %p79 = por %p77, %p78
      %p80 = scmp.ne.s32.totalorder %s71, %s72
      %p81 = scmp.eq.s32.totalorder %s19, 0
      %p82 = por %p80, %p81
      %p83 = scmp.ne.s32.totalorder %s71, %s72
      %p84 = scmp.eq.s32.totalorder %s20, 1
      %p85 = por %p83, %p84
      %p87 = scmp.ne.s32.totalorder %s72, %s86
      %p88 = scmp.eq.s32.totalorder %s20, 0
      %p89 = por %p87, %p88
      %s91 = sadd.s32 %s90, 1
      %p94 = scmp.eq.s32.totalorder %s14, 1
      %p95 = scmp.ne.s32.totalorder %s90, %s92
      %p96 = scmp.eq.s32.totalorder %s14, 0
      %p97 = por %p95, %p96
      %p98 = scmp.ne.s32.totalorder %s90, %s92
      %p99 = scmp.eq.s32.totalorder %s19, 1
      %p100 = por %p98, %p99
      %p101 = scmp.ne.s32.totalorder %s92, %s93
      %p102 = scmp.eq.s32.totalorder %s19, 0
      %p103 = por %p101, %p102
      %p104 = scmp.ne.s32.totalorder %s92, %s93
      %p105 = scmp.eq.s32.totalorder %s20, 1
      %p106 = por %p104, %p105
      %p108 = scmp.ne.s32.totalorder %s93, %s107
      %p109 = scmp.eq.s32.totalorder %s20, 0
      %p110 = por %p108, %p109
      %s112 = sadd.s32 %s111, 1
      %p115 = scmp.eq.s32.totalorder %s14, 1
      %p116 = scmp.ne.s32.totalorder %s111, %s113
      %p117 = scmp.eq.s32.totalorder %s14, 0
      %p118 = por %p116, %p117
      %p119 = scmp.ne.s32.totalorder %s111, %s113
      %p120 = scmp.eq.s32.totalorder %s19, 1
      %p121 = por %p119, %p120
      %p122 = scmp.ne.s32.totalorder %s113, %s114
      %p123 = scmp.eq.s32.totalorder %s19, 0
      %p124 = por %p122, %p123
      %p125 = scmp.ne.s32.totalorder %s113, %s114
      %p126 = scmp.eq.s32.totalorder %s20, 1
      %p127 = por %p125, %p126
      %p129 = scmp.ne.s32.totalorder %s114, %s128
      %p130 = scmp.eq.s32.totalorder %s20, 0
      %p131 = por %p129, %p130
      %s132 = ssub.s32 %s14, %s21
      %p133 = scmp.eq.s32.totalorder %s132, 0
      %s135 = sadd.s32 %s134, 1
      %s136 = scalar_select %p133, %s134, %s135
      %p139 = pneg %p133
      %p140 = scmp.eq.s32.totalorder %s14, 1
      %p141 = por %p139, %p140
      %p142 = scmp.ne.s32.totalorder %s134, %s137
      %p143 = scmp.eq.s32.totalorder %s14, 0
      %p144 = por %p142, %p143
      %p145 = scmp.ne.s32.totalorder %s134, %s137
      %p146 = scmp.eq.s32.totalorder %s19, 1
      %p147 = por %p145, %p146
      %p148 = scmp.ne.s32.totalorder %s137, %s138
      %p149 = scmp.eq.s32.totalorder %s19, 0
      %p150 = por %p148, %p149
      %p151 = scmp.ne.s32.totalorder %s137, %s138
      %p152 = scmp.eq.s32.totalorder %s20, 1
      %p153 = por %p151, %p152
      %p155 = scmp.ne.s32.totalorder %s138, %s154
      %p156 = scmp.eq.s32.totalorder %s20, 0
      %p157 = por %p155, %p156
      %p158 = scmp.le.s32.totalorder 1, %s14
      %p159 = scmp.lt.s32.totalorder %s14, 3
      %p160 = pnand %p158, %p159
      %p161 = pneg %p160
      // Predicated region
      $region9: #{tpu_custom_call.1} parent=5 // pred_check
        _
      $region10: #{tpu_custom_call.1} parent=5 // pred_check_branch
        %163 = sbr.rel (%p160) target = $region12
      $region11: #{tpu_custom_call.1} parent=5 // pred_region
        %s164 = ssub.s32 %s14, 1
        // Predicated region
        $region13: #{tpu_custom_call.1} parent=11 // pred_check
          %p165 = pneg %p61
        $region14: #{tpu_custom_call.1} parent=11 // pred_check_branch
          %167 = sbr.rel (%p165) target = $region16
        $region15: #{tpu_custom_call.1} parent=11 // pred_region
          _
        $region16: #{tpu_custom_call.1} parent=11 // pred_fallthru
          _
        // Predicated region
        $region17: #{tpu_custom_call.1} parent=11 // pred_check
          %p168 = pneg %p82
        $region18: #{tpu_custom_call.1} parent=11 // pred_check_branch
          %170 = sbr.rel (%p168) target = $region20
        $region19: #{tpu_custom_call.1} parent=11 // pred_region
          _
        $region20: #{tpu_custom_call.1} parent=11 // pred_fallthru
          _
        // Predicated region
        $region21: #{tpu_custom_call.1} parent=11 // pred_check
          %p171 = pneg %p103
        $region22: #{tpu_custom_call.1} parent=11 // pred_check_branch
          %173 = sbr.rel (%p171) target = $region24
        $region23: #{tpu_custom_call.1} parent=11 // pred_region
          _
        $region24: #{tpu_custom_call.1} parent=11 // pred_fallthru
          _
        // Predicated region
        $region25: #{tpu_custom_call.1} parent=11 // pred_check
          %p174 = pneg %p124
        $region26: #{tpu_custom_call.1} parent=11 // pred_check_branch
          %176 = sbr.rel (%p174) target = $region28
        $region27: #{tpu_custom_call.1} parent=11 // pred_region
          _
        $region28: #{tpu_custom_call.1} parent=11 // pred_fallthru
          _
      $region12: #{tpu_custom_call.1} parent=5 // pred_fallthru
        _
      %p177 = scmp.lt.s32.totalorder %s14, 2
      // Predicated region
      $region29: #{tpu_custom_call.1} parent=5 // pred_check
        %p178 = pneg %p177
      $region30: #{tpu_custom_call.1} parent=5 // pred_check_branch
        %180 = sbr.rel (%p178) target = $region32
      $region31: #{tpu_custom_call.1} parent=5 // pred_region
        // Predicated region
        $region33: #{tpu_custom_call.1} parent=31 // pred_check
          %p181 = pneg %p34
        $region34: #{tpu_custom_call.1} parent=31 // pred_check_branch
          %183 = sbr.rel (%p181) target = $region36
        $region35: #{tpu_custom_call.1} parent=31 // pred_region
          %p184 = scmp.lt.s32.totalorder %s14, 1
          %s185 = scalar_select %p184, %s14, 1
          %s186 = smul.addr %s185, 8
          %s187 = scalar_lea.vmem %s0, %s186
        $region36: #{tpu_custom_call.1} parent=31 // pred_fallthru
          _
      $region32: #{tpu_custom_call.1} parent=5 // pred_fallthru
        _
      %p188 = scmp.le.s32.totalorder 1, %s14
      %p189 = scmp.lt.s32.totalorder %s14, 3
      %p190 = pnand %p188, %p189
      %p191 = pneg %p190
      // Predicated region
      $region37: #{tpu_custom_call.1} parent=5 // pred_check
        _
      $region38: #{tpu_custom_call.1} parent=5 // pred_check_branch
        %193 = sbr.rel (%p190) target = $region40
      $region39: #{tpu_custom_call.1} parent=5 // pred_region
        %s194 = ssub.s32 %s14, 1
        %p195 = scmp.lt.s32.totalorder %s19, 1
        %s196 = scalar_select %p195, %s19, 1
        %s197 = smul.addr %s196, 8
        %s198 = scalar_lea.vmem %s0, %s197
        %p199 = pneg %p40
        %p200 = pneg %p37
        %p201 = pneg %p61
        %p202 = pneg %p58
        %p203 = pneg %p82
        %p204 = pneg %p79
        %p205 = pneg %p103
        %p206 = pneg %p100
        %p207 = pneg %p124
        %p208 = pneg %p121
        %p209 = pneg %p150
        %p210 = pneg %p147
        %s211 = sand.u32 %s137, 1
        %s212 = scalar_lea.sflag [#allocation3], %s211
        %s213 = sand.u32 %s137, 1
        %s214 = smul.addr %s213, 8
        %s215 = scalar_lea.vmem [#allocation2], %s214
        %p216 = scmp.lt.s32.totalorder %s19, 1
        %s217 = scalar_select %p216, %s19, 1
        %s218 = smul.addr %s217, 8
        %s219 = scalar_lea.vmem %s0, %s218
        %v221 = vld [vmem:[%s219] sm:$0xff]
        %v222 = vld [vmem:[%s1] sm:$0xff]
        %v223 = vld [vmem:[%s1 + $0x8] sm:$0x1]
        %v224 = vld [vmem:[%s2] sm:$0xff]
        %v225 = vld [vmem:[%s2 + $0x8] sm:$0x1]
        %227 = vset.pattern.permute.xlu0 0
        %228 = vperm.xlu0 %227, %v224
        %v229 = vpop.permute.xlu0 %228
        %232 = vset.pattern.permute.xlu0 0
        %233 = vperm.xlu0 %232, %v225
        %v234 = vpop.permute.xlu0 %233
        %vm236 = vcmask 64512
        %v238 = vsel %vm236, %v222, 0
        %v241 = vsel %vm236, %v223, 0
        %243 = vmatprep.subr.mxu0 0.0
        %244 = vmatpush1.msra.mxu0 %v221
        %245 = vmatprep.subr.mxu0 0.0
        %246 = vmatpush1.msra.mxu0 0.0
        %247 = vmatprep.subr.mxu0 0.0
        %248 = vmatpush1.msra.mxu0 0.0
        %249 = vmatprep.subr.mxu0 0.0
        %250 = vmatpush1.msra.mxu0 0.0
        %251 = vmatprep.subr.mxu0 0.0
        %252 = vmatpush1.msra.mxu0 0.0
        %253 = vmatprep.subr.mxu0 0.0
        %254 = vmatpush1.msra.mxu0 0.0
        %255 = vmatprep.subr.mxu0 0.0
        %256 = vmatpush1.msra.mxu0 0.0
        %257 = vmatprep.subr.mxu0 0.0
        %258 = vmatpush1.msra.mxu0 0.0
        %259 = vmatprep.subr.mxu0 0.0
        %260 = vmatpush1.msra.mxu0 0.0
        %261 = vmatprep.subr.mxu0 0.0
        %262 = vmatpush1.msra.mxu0 0.0
        %263 = vmatprep.subr.mxu0 0.0
        %264 = vmatpush1.msra.mxu0 0.0
        %265 = vmatprep.subr.mxu0 0.0
        %266 = vmatpush1.msra.mxu0 0.0
        %267 = vmatprep.subr.mxu0 0.0
        %268 = vmatpush1.msra.mxu0 0.0
        %269 = vmatprep.subr.mxu0 0.0
        %270 = vmatpush1.msra.mxu0 0.0
        %271 = vmatprep.subr.mxu0 0.0
        %272 = vmatpush1.msra.mxu0 0.0
        %273 = vmatprep.subr.mxu0 0.0
        %274 = vmatpush1.msra.mxu0 0.0
        %275 = vmatprep.subr.mxu0 0.0
        %276 = vmatpush1.msra.mxu0 0.0
        %277 = vmatprep.subr.mxu0 0.0
        %278 = vmatpush1.msra.mxu0 0.0
        %279 = vmatprep.subr.mxu0 0.0
        %280 = vmatpush1.msra.mxu0 0.0
        %281 = vmatprep.subr.mxu0 0.0
        %282 = vmatpush1.msra.mxu0 0.0
        %283 = vmatprep.subr.mxu0 0.0
        %284 = vmatpush1.msra.mxu0 0.0
        %285 = vmatprep.subr.mxu0 0.0
        %286 = vmatpush1.msra.mxu0 0.0
        %287 = vmatprep.subr.mxu0 0.0
        %288 = vmatpush1.msra.mxu0 0.0
        %289 = vmatprep.subr.mxu0 0.0
        %290 = vmatpush1.msra.mxu0 0.0
        %291 = vmatprep.subr.mxu0 0.0
        %292 = vmatpush1.msra.mxu0 0.0
        %293 = vmatprep.subr.mxu0 0.0
        %294 = vmatpush1.msra.mxu0 0.0
        %295 = vmatprep.subr.mxu0 0.0
        %296 = vmatpush1.msra.mxu0 0.0
        %297 = vmatprep.subr.mxu0 0.0
        %298 = vmatpush1.msra.mxu0 0.0
        %299 = vmatprep.subr.mxu0 0.0
        %300 = vmatpush1.msra.mxu0 0.0
        %301 = vmatprep.subr.mxu0 0.0
        %302 = vmatpush1.msra.mxu0 0.0
        %303 = vmatprep.subr.mxu0 0.0
        %304 = vmatpush1.msra.mxu0 0.0
        %305 = vmatprep.subr.mxu0 0.0
        %306 = vmatpush1.msra.mxu0 0.0
        %307 = vmatprep.mubr.f32.mxu0 0.0
        %308 = vmatmul.mubr.f32.gmra.mrb[0].mxu0 %v238
        %v309 = vpop.f32.mrb[0].mxu0
        %v310 = vadd.f32 %v229, %v309
        %v311 = vpop.f32.mrb[0].mxu0
        %312 = vmatprep.mubr.f32.mxu0 0.0
        %313 = vmatmul.mubr.f32.gmra.mrb[0].mxu0 %v241
        %v314 = vpop.f32.mrb[0].mxu0
        %v315 = vadd.f32 %v234, %v314
        %v316 = vpop.f32.mrb[0].mxu0
        %317 = vdwg.mxu0
        %v318 = vpack.c.bf16 %v310, %v310
        %v319 = vpack.c.bf16 %v315, %v310
        %320 = vxpose.xlu0.c.b16.start [1/8] %v318, 128
        %321 = vxpose.xlu0.c.b16.cont [2/8] 0, 128
        %322 = vxpose.xlu0.c.b16.cont [3/8] 0, 128
        %323 = vxpose.xlu0.c.b16.cont [4/8] 0, 128
        %324 = vxpose.xlu0.c.b16.cont [5/8] 0, 128
        %325 = vxpose.xlu0.c.b16.cont [6/8] 0, 128
        %326 = vxpose.xlu0.c.b16.cont [7/8] 0, 128
        %327 = vxpose.xlu0.c.b16.end [8/8] 0, 128
        %v328 = vpop.trf.xlu0
        %v329 = vpop.trf.xlu0
        %v330 = vpop.trf.xlu0
        %v331 = vpop.trf.xlu0
        %v332 = vpop.trf.xlu0
        %v333 = vpop.trf.xlu0
        %v334 = vpop.trf.xlu0
        %v335 = vpop.trf.xlu0
        %vm336 = vcmask 31744
        %v338 = vsel %vm336, %v328, 0
        %v341 = vsel %vm336, %v329, 0
        %v344 = vsel %vm336, %v330, 0
        %v347 = vsel %vm336, %v331, 0
        %v350 = vsel %vm336, %v332, 0
        %v353 = vsel %vm336, %v333, 0
        %v356 = vsel %vm336, %v334, 0
        %v359 = vsel %vm336, %v335, 0
        %vm361 = vcmask 1041408
        %v363 = vsel %vm361, %v318, 0
        %365 = vmatprep.subr.bf16.mxu0 0
        %366 = vmatpush1.bf16.msra.mxu0 %v363
        %367 = vmatprep.subr.bf16.mxu0 0
        %368 = vmatpush1.bf16.msra.mxu0 0
        %369 = vmatprep.subr.bf16.mxu0 0
        %370 = vmatpush1.bf16.msra.mxu0 0
        %371 = vmatprep.subr.bf16.mxu0 0
        %372 = vmatpush1.bf16.msra.mxu0 0
        %373 = vmatprep.subr.bf16.mxu0 0
        %374 = vmatpush1.bf16.msra.mxu0 0
        %375 = vmatprep.subr.bf16.mxu0 0
        %376 = vmatpush1.bf16.msra.mxu0 0
        %377 = vmatprep.subr.bf16.mxu0 0
        %378 = vmatpush1.bf16.msra.mxu0 0
        %379 = vmatprep.subr.bf16.mxu0 0
        %380 = vmatpush1.bf16.msra.mxu0 0
        %381 = vmatprep.subr.bf16.mxu0 0
        %382 = vmatpush1.bf16.msra.mxu0 0
        %383 = vmatprep.subr.bf16.mxu0 0
        %384 = vmatpush1.bf16.msra.mxu0 0
        %385 = vmatprep.subr.bf16.mxu0 0
        %386 = vmatpush1.bf16.msra.mxu0 0
        %387 = vmatprep.subr.bf16.mxu0 0
        %388 = vmatpush1.bf16.msra.mxu0 0
        %389 = vmatprep.subr.bf16.mxu0 0
        %390 = vmatpush1.bf16.msra.mxu0 0
        %391 = vmatprep.subr.bf16.mxu0 0
        %392 = vmatpush1.bf16.msra.mxu0 0
        %393 = vmatprep.subr.bf16.mxu0 0
        %394 = vmatpush1.bf16.msra.mxu0 0
        %395 = vmatprep.subr.bf16.mxu0 0
        %396 = vmatpush1.bf16.msra.mxu0 0
        %397 = vmatprep.mubr.bf16.mxu0 0
        %398 = vmatmul.mubr.bf16.gmra.mrb[0].mxu0 %v338
        %v399 = vpop.f32.mrb[0].mxu0
        %v400 = vadd.f32 0.0, %v399
        %v401 = vpop.f32.mrb[0].mxu0
        %v402 = vpop.f32.mrb[0].mxu0
        %v403 = vadd.f32 0.0, %v402
        %v404 = vpop.f32.mrb[0].mxu0
        %405 = vmatprep.mubr.bf16.mxu0 0
        %406 = vmatmul.mubr.bf16.gmra.mrb[0].mxu0 %v341
        %v407 = vpop.f32.mrb[0].mxu0
        %v408 = vadd.f32 0.0, %v407
        %v409 = vpop.f32.mrb[0].mxu0
        %v410 = vpop.f32.mrb[0].mxu0
        %v411 = vadd.f32 0.0, %v410
        %v412 = vpop.f32.mrb[0].mxu0
        %413 = vmatprep.mubr.bf16.mxu0 0
        %414 = vmatmul.mubr.bf16.gmra.mrb[0].mxu0 %v344
        %v415 = vpop.f32.mrb[0].mxu0
        %v416 = vadd.f32 0.0, %v415
        %v417 = vpop.f32.mrb[0].mxu0
        %v418 = vpop.f32.mrb[0].mxu0
        %v419 = vadd.f32 0.0, %v418
        %v420 = vpop.f32.mrb[0].mxu0
        %421 = vmatprep.mubr.bf16.mxu0 0
        %422 = vmatmul.mubr.bf16.gmra.mrb[0].mxu0 %v347
        %v423 = vpop.f32.mrb[0].mxu0
        %v424 = vadd.f32 0.0, %v423
        %v425 = vpop.f32.mrb[0].mxu0
        %v426 = vpop.f32.mrb[0].mxu0
        %v427 = vadd.f32 0.0, %v426
        %v428 = vpop.f32.mrb[0].mxu0
        %429 = vmatprep.mubr.bf16.mxu0 0
        %430 = vmatmul.mubr.bf16.gmra.mrb[0].mxu0 %v350
        %v431 = vpop.f32.mrb[0].mxu0
        %v432 = vadd.f32 0.0, %v431
        %v433 = vpop.f32.mrb[0].mxu0
        %v434 = vpop.f32.mrb[0].mxu0
        %v435 = vadd.f32 0.0, %v434
        %v436 = vpop.f32.mrb[0].mxu0
        %437 = vmatprep.mubr.bf16.mxu0 0
        %438 = vmatmul.mubr.bf16.gmra.mrb[0].mxu0 %v353
        %v439 = vpop.f32.mrb[0].mxu0
        %v440 = vadd.f32 0.0, %v439
        %v441 = vpop.f32.mrb[0].mxu0
        %v442 = vpop.f32.mrb[0].mxu0
        %v443 = vadd.f32 0.0, %v442
        %v444 = vpop.f32.mrb[0].mxu0
        %445 = vmatprep.mubr.bf16.mxu0 0
        %446 = vmatmul.mubr.bf16.gmra.mrb[0].mxu0 %v356
        %v447 = vpop.f32.mrb[0].mxu0
        %v448 = vadd.f32 0.0, %v447
        %v449 = vpop.f32.mrb[0].mxu0
        %v450 = vpop.f32.mrb[0].mxu0
        %v451 = vadd.f32 0.0, %v450
        %v452 = vpop.f32.mrb[0].mxu0
        %453 = vmatprep.mubr.bf16.mxu0 0
        %454 = vmatmul.mubr.bf16.gmra.mrb[0].mxu0 %v359
        %v455 = vpop.f32.mrb[0].mxu0
        %v456 = vadd.f32 0.0, %v455
        %v457 = vpop.f32.mrb[0].mxu0
        %v458 = vpop.f32.mrb[0].mxu0
        %v459 = vadd.f32 0.0, %v458
        %v460 = vpop.f32.mrb[0].mxu0
        %461 = vdwg.mxu0
        %v462 = vlaneseq
        %v463 = vand.u32 %v462, 127
        %vm464 = vcmp.lt.s32.totalorder %v463, 64
        %v465 = vsel %vm464, 1, 0
        %vm466 = vcmp.eq.s32.totalorder %v465, 1
        %v467 = vsel %vm466, %v400, -1e+30
        %v468 = vsel %vm466, %v403, -1e+30
        %v469 = vsel %vm466, %v408, -1e+30
        %v470 = vsel %vm466, %v411, -1e+30
        %v471 = vsel %vm466, %v416, -1e+30
        %v472 = vsel %vm466, %v419, -1e+30
        %v473 = vsel %vm466, %v424, -1e+30
        %v474 = vsel %vm466, %v427, -1e+30
        %v475 = vsel %vm466, %v432, -1e+30
        %v476 = vsel %vm466, %v435, -1e+30
        %v477 = vsel %vm466, %v440, -1e+30
        %v478 = vsel %vm466, %v443, -1e+30
        %v479 = vsel %vm466, %v448, -1e+30
        %v480 = vsel %vm466, %v451, -1e+30
        %v481 = vsel %vm466, %v456, -1e+30
        %v482 = vsel %vm466, %v459, -1e+30
        %483 = vmax.xlane.f32.xlu0 %v467
        %v484 = vpop.xlane.xlu0 %483
        %485 = vmax.xlane.f32.xlu0 %v468
        %v486 = vpop.xlane.xlu0 %485
        %487 = vmax.xlane.f32.xlu0 %v469
        %v488 = vpop.xlane.xlu0 %487
        %489 = vmax.xlane.f32.xlu0 %v470
        %v490 = vpop.xlane.xlu0 %489
        %491 = vmax.xlane.f32.xlu0 %v471
        %v492 = vpop.xlane.xlu0 %491
        %493 = vmax.xlane.f32.xlu0 %v472
        %v494 = vpop.xlane.xlu0 %493
        %495 = vmax.xlane.f32.xlu0 %v473
        %v496 = vpop.xlane.xlu0 %495
        %497 = vmax.xlane.f32.xlu0 %v474
        %v498 = vpop.xlane.xlu0 %497
        %499 = vmax.xlane.f32.xlu0 %v475
        %v500 = vpop.xlane.xlu0 %499
        %501 = vmax.xlane.f32.xlu0 %v476
        %v502 = vpop.xlane.xlu0 %501
        %503 = vmax.xlane.f32.xlu0 %v477
        %v504 = vpop.xlane.xlu0 %503
        %505 = vmax.xlane.f32.xlu0 %v478
        %v506 = vpop.xlane.xlu0 %505
        %507 = vmax.xlane.f32.xlu0 %v479
        %v508 = vpop.xlane.xlu0 %507
        %509 = vmax.xlane.f32.xlu0 %v480
        %v510 = vpop.xlane.xlu0 %509
        %511 = vmax.xlane.f32.xlu0 %v481
        %v512 = vpop.xlane.xlu0 %511
        %513 = vmax.xlane.f32.xlu0 %v482
        %v514 = vpop.xlane.xlu0 %513
        %v515 = vsub.f32 %v467, %v484
        %v516 = vsub.f32 %v468, %v486
        %v517 = vsub.f32 %v469, %v488
        %v518 = vsub.f32 %v470, %v490
        %v519 = vsub.f32 %v471, %v492
        %v520 = vsub.f32 %v472, %v494
        %v521 = vsub.f32 %v473, %v496
        %v522 = vsub.f32 %v474, %v498
        %v523 = vsub.f32 %v475, %v500
        %v524 = vsub.f32 %v476, %v502
        %v525 = vsub.f32 %v477, %v504
        %v526 = vsub.f32 %v478, %v506
        %v527 = vsub.f32 %v479, %v508
        %v528 = vsub.f32 %v480, %v510
        %v529 = vsub.f32 %v481, %v512
        %v530 = vsub.f32 %v482, %v514
        %v531 = vmul.f32 %v515, 1.442695
        %v532 = vpow.pop %v531
        %v533 = vmul.f32 %v516, 1.442695
        %v534 = vpow.pop %v533
        %v535 = vmul.f32 %v517, 1.442695
        %v536 = vpow.pop %v535
        %v537 = vmul.f32 %v518, 1.442695
        %v538 = vpow.pop %v537
        %v539 = vmul.f32 %v519, 1.442695
        %v540 = vpow.pop %v539
        %v541 = vmul.f32 %v520, 1.442695
        %v542 = vpow.pop %v541
        %v543 = vmul.f32 %v521, 1.442695
        %v544 = vpow.pop %v543
        %v545 = vmul.f32 %v522, 1.442695
        %v546 = vpow.pop %v545
        %v547 = vmul.f32 %v523, 1.442695
        %v548 = vpow.pop %v547
        %v549 = vmul.f32 %v524, 1.442695
        %v550 = vpow.pop %v549
        %v551 = vmul.f32 %v525, 1.442695
        %v552 = vpow.pop %v551
        %v553 = vmul.f32 %v526, 1.442695
        %v554 = vpow.pop %v553
        %v555 = vmul.f32 %v527, 1.442695
        %v556 = vpow.pop %v555
        %v557 = vmul.f32 %v528, 1.442695
        %v558 = vpow.pop %v557
        %v559 = vmul.f32 %v529, 1.442695
        %v560 = vpow.pop %v559
        %v561 = vmul.f32 %v530, 1.442695
        %v562 = vpow.pop %v561
        %v563 = vpack.c.bf16 %v534, %v532
        %v564 = vpack.c.bf16 %v538, %v536
        %v565 = vpack.c.bf16 %v542, %v540
        %v566 = vpack.c.bf16 %v546, %v544
        %v567 = vpack.c.bf16 %v550, %v548
        %v568 = vpack.c.bf16 %v554, %v552
        %v569 = vpack.c.bf16 %v558, %v556
        %v570 = vpack.c.bf16 %v562, %v560
        %v572 = vrot.slane %v319, 2
        %574 = vmatprep.subr.bf16.mxu0 0
        %575 = vmatpush1.bf16.xpose.msra.mxu0 %v563
        %576 = vmatprep.subr.bf16.mxu0 0
        %577 = vmatpush1.bf16.xpose.msra.mxu0 %v564
        %578 = vmatprep.subr.bf16.mxu0 0
        %579 = vmatpush1.bf16.xpose.msra.mxu0 %v565
        %580 = vmatprep.subr.bf16.mxu0 0
        %581 = vmatpush1.bf16.xpose.msra.mxu0 %v566
        %582 = vmatprep.subr.bf16.mxu0 0
        %583 = vmatpush1.bf16.xpose.msra.mxu0 %v567
        %584 = vmatprep.subr.bf16.mxu0 0
        %585 = vmatpush1.bf16.xpose.msra.mxu0 %v568
        %586 = vmatprep.subr.bf16.mxu0 0
        %587 = vmatpush1.bf16.xpose.msra.mxu0 %v569
        %588 = vmatprep.subr.bf16.mxu0 0
        %589 = vmatpush1.bf16.xpose.msra.mxu0 %v570
        %590 = vmatprep.subr.bf16.mxu0 0
        %591 = vmatpush1.bf16.xpose.msra.mxu0 0
        %592 = vmatprep.subr.bf16.mxu0 0
        %593 = vmatpush1.bf16.xpose.msra.mxu0 0
        %594 = vmatprep.subr.bf16.mxu0 0
        %595 = vmatpush1.bf16.xpose.msra.mxu0 0
        %596 = vmatprep.subr.bf16.mxu0 0
        %597 = vmatpush1.bf16.xpose.msra.mxu0 0
        %598 = vmatprep.subr.bf16.mxu0 0
        %599 = vmatpush1.bf16.xpose.msra.mxu0 0
        %600 = vmatprep.subr.bf16.mxu0 0
        %601 = vmatpush1.bf16.xpose.msra.mxu0 0
        %602 = vmatprep.subr.bf16.mxu0 0
        %603 = vmatpush1.bf16.xpose.msra.mxu0 0
        %604 = vmatprep.subr.bf16.mxu0 0
        %605 = vmatpush1.bf16.xpose.msra.mxu0 0
        %606 = vmatprep.mubr.bf16.mxu0 0
        %607 = vmatmul.mubr.bf16.gmra.mrb[0].mxu0 %v572
        %v608 = vpop.f32.mrb[0].mxu0
        %v609 = vadd.f32 0.0, %v608
        %v610 = vpop.f32.mrb[0].mxu0
        %v611 = vpop.f32.mrb[0].mxu0
        %v612 = vpop.f32.mrb[0].mxu0
        %613 = vdwg.mxu0
        %v614 = vrcp.pop %v609
        %v615 = vmul.f32 %v609, %v614
        %v616 = vsub.f32 2.0, %v615
        %v617 = vmul.f32 %v614, %v616
        %v618 = vlaneseq
        %v619 = vshrl.u32 %v618, 7
        %v620 = vsub.s32 4, %v619
        %v621 = vrot.slane %v617, %v620
        %v622 = vmul.f32 %v609, %v621
        %v623 = vld [vmem:[%s3] sm:$0xff]
        %v624 = vld [vmem:[%s4] sm:$0xff]
        %626 = vset.pattern.permute.xlu0 0
        %627 = vperm.xlu0 %626, %v624
        %v628 = vpop.permute.xlu0 %627
        %v631 = vsel %vm336, %v623, 0
        %vm633 = vcmask 1043456
        %v635 = vsel %vm633, %v622, 0
        %637 = vmatprep.subr.mxu0 0.0
        %638 = vmatpush1.msra.mxu0 %v635
        %639 = vmatprep.subr.mxu0 0.0
        %640 = vmatpush1.msra.mxu0 0.0
        %641 = vmatprep.subr.mxu0 0.0
        %642 = vmatpush1.msra.mxu0 0.0
        %643 = vmatprep.subr.mxu0 0.0
        %644 = vmatpush1.msra.mxu0 0.0
        %645 = vmatprep.subr.mxu0 0.0
        %646 = vmatpush1.msra.mxu0 0.0
        %647 = vmatprep.subr.mxu0 0.0
        %648 = vmatpush1.msra.mxu0 0.0
        %649 = vmatprep.subr.mxu0 0.0
        %650 = vmatpush1.msra.mxu0 0.0
        %651 = vmatprep.subr.mxu0 0.0
        %652 = vmatpush1.msra.mxu0 0.0
        %653 = vmatprep.subr.mxu0 0.0
        %654 = vmatpush1.msra.mxu0 0.0
        %655 = vmatprep.subr.mxu0 0.0
        %656 = vmatpush1.msra.mxu0 0.0
        %657 = vmatprep.subr.mxu0 0.0
        %658 = vmatpush1.msra.mxu0 0.0
        %659 = vmatprep.subr.mxu0 0.0
        %660 = vmatpush1.msra.mxu0 0.0
        %661 = vmatprep.subr.mxu0 0.0
        %662 = vmatpush1.msra.mxu0 0.0
        %663 = vmatprep.subr.mxu0 0.0
        %664 = vmatpush1.msra.mxu0 0.0
        %665 = vmatprep.subr.mxu0 0.0
        %666 = vmatpush1.msra.mxu0 0.0
        %667 = vmatprep.subr.mxu0 0.0
        %668 = vmatpush1.msra.mxu0 0.0
        %669 = vmatprep.subr.mxu0 0.0
        %670 = vmatpush1.msra.mxu0 0.0
        %671 = vmatprep.subr.mxu0 0.0
        %672 = vmatpush1.msra.mxu0 0.0
        %673 = vmatprep.subr.mxu0 0.0
        %674 = vmatpush1.msra.mxu0 0.0
        %675 = vmatprep.subr.mxu0 0.0
        %676 = vmatpush1.msra.mxu0 0.0
        %677 = vmatprep.subr.mxu0 0.0
        %678 = vmatpush1.msra.mxu0 0.0
        %679 = vmatprep.subr.mxu0 0.0
        %680 = vmatpush1.msra.mxu0 0.0
        %681 = vmatprep.subr.mxu0 0.0
        %682 = vmatpush1.msra.mxu0 0.0
        %683 = vmatprep.subr.mxu0 0.0
        %684 = vmatpush1.msra.mxu0 0.0
        %685 = vmatprep.subr.mxu0 0.0
        %686 = vmatpush1.msra.mxu0 0.0
        %687 = vmatprep.subr.mxu0 0.0
        %688 = vmatpush1.msra.mxu0 0.0
        %689 = vmatprep.subr.mxu0 0.0
        %690 = vmatpush1.msra.mxu0 0.0
        %691 = vmatprep.subr.mxu0 0.0
        %692 = vmatpush1.msra.mxu0 0.0
        %693 = vmatprep.subr.mxu0 0.0
        %694 = vmatpush1.msra.mxu0 0.0
        %695 = vmatprep.subr.mxu0 0.0
        %696 = vmatpush1.msra.mxu0 0.0
        %697 = vmatprep.subr.mxu0 0.0
        %698 = vmatpush1.msra.mxu0 0.0
        %699 = vmatprep.subr.mxu0 0.0
        %700 = vmatpush1.msra.mxu0 0.0
        %701 = vmatprep.mubr.f32.mxu0 0.0
        %702 = vmatmul.mubr.f32.gmra.mrb[0].mxu0 %v631
        %v703 = vpop.f32.mrb[0].mxu0
        %v704 = vadd.f32 %v628, %v703
        %v705 = vpop.f32.mrb[0].mxu0
        %706 = vdwg.mxu0
        %707 = vst [vmem:[%s215] sm:$0xff] %v704
        %s708 = sand.u32 %s137, 1
        %s709 = scalar_lea.sflag [#allocation3], %s708
        %s710 = sand.u32 %s137, 1
        %s711 = smul.addr %s710, 8
        %s712 = scalar_lea.vmem [#allocation2], %s711
        // Predicated region
        $region41: #{tpu_custom_call.1} parent=39 // pred_check
          %p713 = pneg %p147
        $region42: #{tpu_custom_call.1} parent=39 // pred_check_branch
          %715 = sbr.rel (%p713) target = $region44
        $region43: #{tpu_custom_call.1} parent=39 // pred_region
          %s717 = ssub.s32 128, 128
          %718 = vsyncadd %s709, %s717
          %s719 = smul.addr %s19, 128
          %s720 = scalar_lea.hbm %s5, %s719
          %s722 = sshll.u32 %s712, 4
          %s723 = int_to_ptr.vmem [resolvable:$true] %s722
          %725 = dma.vmem_to_hbm [thread:$0]  %s723, 128, %s720, %s709
        $region44: #{tpu_custom_call.1} parent=39 // pred_fallthru
          _
      $region40: #{tpu_custom_call.1} parent=5 // pred_fallthru
        _
      %p726 = scmp.le.s32.totalorder 2, %s14
      // Predicated region
      $region45: #{tpu_custom_call.1} parent=5 // pred_check
        %p727 = pneg %p726
      $region46: #{tpu_custom_call.1} parent=5 // pred_check_branch
        %729 = sbr.rel (%p727) target = $region48
      $region47: #{tpu_custom_call.1} parent=5 // pred_region
        %s730 = ssub.s32 %s14, 2
        // Predicated region
        $region49: #{tpu_custom_call.1} parent=47 // pred_check
          %p731 = pneg %p153
        $region50: #{tpu_custom_call.1} parent=47 // pred_check_branch
          %733 = sbr.rel (%p731) target = $region52
        $region51: #{tpu_custom_call.1} parent=47 // pred_region
          %s734 = sand.u32 %s138, 1
          %s735 = scalar_lea.sflag [#allocation3], %s734
          %s736 = sand.u32 %s138, 1
          %s737 = smul.addr %s736, 8
          %s738 = scalar_lea.vmem [#allocation2], %s737
          %739 = dma.done %s735, 128
        $region52: #{tpu_custom_call.1} parent=47 // pred_fallthru
          _
      $region48: #{tpu_custom_call.1} parent=5 // pred_fallthru
        _
    $region6: #{tpu_custom_call.1} parent=1 // loop_footer
      %s18 = sadd.s32 1, %s14
    $region7: #{tpu_custom_call.1} parent=1 // loop_footer_branch
      %13 = sbr.rel target = $region3
    $region8: #{tpu_custom_call.1} parent=1 // loop_exit
      _
    %740 = vsyncpa [#allocation3], 1
    %s741 = scalar_lea.sflag [#allocation3], 1
    %742 = vsyncpa %s741, 1

</llo_original>
